<compile_context>
chip_gen: v5e
topology: v5e:2x2
jax: 0.10.0
libtpu: 0.0.40
codegen_flags: <defaults>
</compile_context>

<pallas_src>
import jax
import jax.numpy as jnp
from jax.experimental import pallas as pl
from jax.experimental.pallas import tpu as pltpu


# ------------------------------ Pallas kernel -------------------------------

def _fusion_kernel(p_ref, x_ref, a_ref, o_ref):
    # p_ref/x_ref/o_ref: (TM, TS) tiles; a_ref: (TM, 1) per-row (per-channel)
    # scale.  VPU elementwise only; dtype preserved end-to-end.
    o_ref[...] = p_ref[...] + a_ref[...] * x_ref[...]


# ------------------------------ host wrapper --------------------------------

def _round_up(x, m):
    return (x + m - 1) // m * m


def _pad2d(a, rows, cols):
    r, c = a.shape
    if r == rows and c == cols:
        return a
    return jnp.pad(a, ((0, rows - r), (0, cols - c)))


def fusion_forward(primary, auxiliary, alpha):
    """primary, auxiliary: (N, C, D, H, W); alpha: (1, C, 1, 1, 1)."""
    if primary.shape[2:] != auxiliary.shape[2:]:
        raise ValueError(
            f"Spatial dimensions of primary features {primary.shape[2:]} and "
            f"auxiliary features {auxiliary.shape[2:]} must match for fusion.")
    if primary.shape[:2] != auxiliary.shape[:2]:
        raise ValueError("Batch/channel dims must match for the fused add.")

    n, c = primary.shape[:2]
    m = n * c
    s = 1
    for dim in primary.shape[2:]:
        s *= dim

    # Free reshapes: (N, C, D, H, W) -> (N*C, D*H*W).  Channels stay on the
    # slow (sublane-major) axis, flattened spatial is the lane-dense fast axis.
    p2 = primary.reshape(m, s)
    x2 = auxiliary.reshape(m, s)
    # Per-row alpha: row index = n_idx * C + c_idx -> alpha[c_idx].
    a_col = jnp.tile(alpha.reshape(c), (n,)).reshape(m, 1)

    # Tile sizes: as large as practical, padding only as far as the tile
    # requires.  ts is a multiple of 128 (lane-dense), tm a multiple of 8.
    ts = min(_round_up(s, 128), 2048)
    sp = _round_up(s, ts)
    tm = min(_round_up(m, 8), 128)
    mp = _round_up(m, tm)

    p2 = _pad2d(p2, mp, sp)
    x2 = _pad2d(x2, mp, sp)
    a_col = _pad2d(a_col, mp, 1)

    grid = (mp // tm, sp // ts)
    out = pl.pallas_call(
        _fusion_kernel,
        out_shape=jax.ShapeDtypeStruct((mp, sp), primary.dtype),
        grid=grid,
        in_specs=[
            pl.BlockSpec((tm, ts), lambda i, j: (i, j)),
            pl.BlockSpec((tm, ts), lambda i, j: (i, j)),
            pl.BlockSpec((tm, 1), lambda i, j: (i, 0)),
        ],
        out_specs=pl.BlockSpec((tm, ts), lambda i, j: (i, j)),
        compiler_params=pltpu.CompilerParams(
            dimension_semantics=("parallel", "parallel")),
    )(p2, x2, a_col)

    return out[:m, :s].reshape(primary.shape)


# ---------------------------------- main -------------------------------------

if __name__ == "__main__":
    key = jax.random.PRNGKey(0)
    k1, k2, k3 = jax.random.split(key, 3)

    N, C, D, H, W = 2, 4, 16, 16, 16
    primary = jax.random.normal(k1, (N, C, D, H, W), jnp.float32)
    auxiliary = jax.random.normal(k2, (N, C, D, H, W), jnp.float32)
    # nn.Parameter is initialized to ones; perturb it so the check is
    # non-trivial (exercises the per-channel broadcast path).
    alpha = (jnp.ones((1, C, 1, 1, 1), jnp.float32)
             + 0.1 * jax.random.normal(k3, (1, C, 1, 1, 1), jnp.float32))

    fwd = jax.jit(fusion_forward)
    y = jax.block_until_ready(fwd(primary, auxiliary, alpha))

    ref = primary + alpha * auxiliary
    assert y.shape == ref.shape, (y.shape, ref.shape)
    assert bool(jnp.all(jnp.isfinite(y)))
    assert bool(jnp.allclose(y, ref, atol=1e-6, rtol=1e-6))
    print("KERNEL_OK")
</pallas_src>

<mosaic_0001>
module attributes {stable_mosaic.version = 11 : i64} {
  func.func @_fusion_kernel(%arg0: i32, %arg1: i32, %arg2: memref<8x2048xf32, #tpu.memory_space<vmem>>, %arg3: memref<8x2048xf32, #tpu.memory_space<vmem>>, %arg4: memref<8x1xf32, #tpu.memory_space<vmem>>, %arg5: memref<8x2048xf32, #tpu.memory_space<vmem>>) attributes {dimension_semantics = [#tpu.dimension_semantics<parallel>, #tpu.dimension_semantics<parallel>], iteration_bounds = array<i64: 1, 2>, scalar_prefetch = 0 : i64, scratch_operands = 0 : i64, tpu.core_type = #tpu.core_type<tc>, window_params = [{transform_indices = @transform_0, window_bounds = array<i64: 8, 2048>}, {transform_indices = @transform_1, window_bounds = array<i64: 8, 2048>}, {transform_indices = @transform_2, window_bounds = array<i64: 8, 1>}, {transform_indices = @transform_3, window_bounds = array<i64: 8, 2048>}]} {
    %c0 = arith.constant 0 : index
    %c0_0 = arith.constant 0 : index
    %0 = vector.load %arg2[%c0, %c0_0] : memref<8x2048xf32, #tpu.memory_space<vmem>>, vector<8x2048xf32>
    %c0_1 = arith.constant 0 : index
    %c0_2 = arith.constant 0 : index
    %1 = vector.load %arg4[%c0_1, %c0_2] : memref<8x1xf32, #tpu.memory_space<vmem>>, vector<8x1xf32>
    %c0_3 = arith.constant 0 : index
    %c0_4 = arith.constant 0 : index
    %2 = vector.load %arg3[%c0_3, %c0_4] : memref<8x2048xf32, #tpu.memory_space<vmem>>, vector<8x2048xf32>
    %3 = vector.broadcast %1 : vector<8x1xf32> to vector<8x2048xf32>
    %4 = arith.mulf %3, %2 : vector<8x2048xf32>
    %5 = arith.addf %0, %4 : vector<8x2048xf32>
    %c0_5 = arith.constant 0 : index
    %c0_6 = arith.constant 0 : index
    %6 = vector.load %arg5[%c0_5, %c0_6] : memref<8x2048xf32, #tpu.memory_space<vmem>>, vector<8x2048xf32>
    tpu.vector_store %arg5[%c0_5, %c0_6], %5 {strides = array<i32>} : memref<8x2048xf32, #tpu.memory_space<vmem>>, vector<8x2048xf32>,
    return
  }
  func.func @transform_0(%arg0: i32, %arg1: i32) -> (i32, i32) {
    %c0_i32 = arith.constant 0 : i32
    return %arg0, %arg1 : i32, i32
  }
  func.func @transform_1(%arg0: i32, %arg1: i32) -> (i32, i32) {
    %c0_i32 = arith.constant 0 : i32
    return %arg0, %arg1 : i32, i32
  }
  func.func @transform_2(%arg0: i32, %arg1: i32) -> (i32, i32) {
    %c0_i32 = arith.constant 0 : i32
    %c0_i32_0 = arith.constant 0 : i32
    return %arg0, %c0_i32 : i32, i32
  }
  func.func @transform_3(%arg0: i32, %arg1: i32) -> (i32, i32) {
    %c0_i32 = arith.constant 0 : i32
    return %arg0, %arg1 : i32, i32
  }
}

</mosaic_0001>

<llo_original>
// kernel: tile.0
$region0: #{tile.0}
  %s0 = inlined_call_operand.vmem [shape: f32[2,4], index: 0, kind: input, shape index: {}]
  %s1 = inlined_call_operand.vmem [shape: f32[8,1], index: 1, kind: output, shape index: {}]
  $region1: #{tile.0} parent=0
    #allocation0 [shape = 'u8[4096]{0}', space=vmem, size = 0x1000, scoped, tag = 'scoped mem for input reshape']
    %s3 = ssub.s32 4, 1
    %v4 = vld [vmem:[%s0] sm:%s3]
    %5 = vst [vmem:[#allocation0] sm:%s3] %v4
    %v6 = vld [vmem:[#allocation0] sm:$0x3]
    %vm7 = vcmask 7168
    %8 = vst.msk [vmem:[%s1] ss:$4 sm:$0x3] %vm7, %v6
    %v9 = vld [vmem:[#allocation0] sm:$0x3]
    %10 = vrot.lane.b32.xlu0 %v9, 127
    %v11 = vpop.permute.xlu0 %10
    %vm12 = vcmask 7168
    %s13 = scalar_lea.vmem %s1, 1
    %14 = vst.msk [vmem:[%s13] ss:$4 sm:$0x3] %vm12, %v11
    %v15 = vld [vmem:[#allocation0] sm:$0x3]
    %16 = vrot.lane.b32.xlu0 %v15, 126
    %v17 = vpop.permute.xlu0 %16
    %vm18 = vcmask 7168
    %s19 = scalar_lea.vmem %s1, 2
    %20 = vst.msk [vmem:[%s19] ss:$4 sm:$0x3] %vm18, %v17
    %v21 = vld [vmem:[#allocation0] sm:$0x3]
    %22 = vrot.lane.b32.xlu0 %v21, 125
    %v23 = vpop.permute.xlu0 %22
    %vm24 = vcmask 7168
    %s25 = scalar_lea.vmem %s1, 3
    %26 = vst.msk [vmem:[%s25] ss:$4 sm:$0x3] %vm24, %v23

// kernel: tile.6
$region0: #{tile.6}
  #allocation0 [shape = 's32[1]{0}', space=sflag, size = 0x4, scoped, tag = 'scoped memory for tile.6']
  %s0 = inlined_call_operand.vmem [shape: f32[4], index: 0, kind: input, shape index: {}]
  %s1 = inlined_call_operand.vmem [shape: f32[2,4], index: 1, kind: output, shape index: {}]
  // Predicated region
  $region2: #{tile.6} parent=0 // pred_check
    _
  $region3: #{tile.6} parent=0 // pred_check_branch
    %3 = sbr.rel (0) target = $region5
  $region4: #{tile.6} parent=0 // pred_region
    _
  $region5: #{tile.6} parent=0 // pred_fallthru
    _
  %v4 = vld [vmem:[%s0] ss:$0 sm:$0xff]
  %5 = vst [vmem:[%s1] sm:$0x3] %v4

</llo_original>
